<compile_context>
chip_gen: v7x
topology: tpu7x:2x2x1
jax: 0.10.0
libtpu: 0.0.40
codegen_flags: <defaults>
</compile_context>

<pallas_src>
import functools

import jax
import jax.numpy as jnp
import numpy as np
from jax import lax
from jax.experimental import pallas as pl
from jax.experimental.pallas import tpu as pltpu


# --------------------------- glue: unfold (im2col) ---------------------------
def unfold_to_patches(x, kernel_size, stride):
    """nn.Unfold(kernel_size, stride, padding=0) -> (B, P, D).

    Uses static strided slices (TPU-friendly, no gather). D is ordered
    (C, kh, kw) to match U.reshape(K, D); P is ordered (patch_row, patch_col)
    to match r.reshape(K, P).
    """
    B, C, H, W = x.shape
    kh, kw = kernel_size
    sh, sw = stride
    nph = (H - kh) // sh + 1
    npw = (W - kw) // sw + 1
    xt = jnp.transpose(x, (0, 2, 3, 1))                       # (B, H, W, C), once
    cols = []
    for di in range(kh):
        for dj in range(kw):
            cols.append(xt[:, di:di + (nph - 1) * sh + 1:sh,
                           dj:dj + (npw - 1) * sw + 1:sw, :])  # (B, nph, npw, C)
    p = jnp.stack(cols, axis=-1)                               # (B, nph, npw, C, kh*kw)
    return p.reshape(B, nph * npw, C * kh * kw), nph, npw


# ------------------------------ Pallas kernel --------------------------------
def _pc_kernel(patches_ref, r_ref, u_ref, out_ref, pred_ref):
    b = pl.program_id(1)

    @pl.when(b == 0)
    def _():
        # Prediction depends only on the P tile: compute once on the MXU and
        # reuse it for all batch tiles.
        pred_ref[...] = jnp.tanh(
            jnp.dot(r_ref[...], u_ref[...], preferred_element_type=jnp.float32))
        out_ref[...] = jnp.zeros_like(out_ref)

    err = patches_ref[...] - pred_ref[...][None, :, :]          # (Bt, Pt, D)
    sq_sum = jnp.sum(err * err)
    abs_sum = jnp.sum(jnp.abs(err))

    # Pack both partial sums into one lane-dense (1, 8, 128) output block that
    # stays resident across the (innermost) batch axis:
    #   sublane 0 carries sum(err^2), sublane 1 carries sum(|err|).
    sub = lax.broadcasted_iota(jnp.int32, out_ref.shape, 1)
    out_ref[...] += jnp.where(sub == 0, sq_sum,
                              jnp.where(sub == 1, abs_sum, 0.0))


# ------------------------------ tiling helpers --------------------------------
def _round_up(n, m):
    return ((n + m - 1) // m) * m


def _choose_tiles(B, P, D, dtype_bytes=4, budget_bytes=2 << 20):
    """p_tile: multiple of 8 (sublane/MXU friendly), as large as sensible;
    b_tile: divisor of B. The patches block is kept under ~2 MiB so the
    double-buffered pipeline (plus the (p_tile, D) prediction scratch) fits
    comfortably in scoped VMEM on v5e/v6e/v7x while staying DMA-efficient."""
    p_tile = min(_round_up(P, 8), 1024)
    b_tile = B
    while b_tile > 1 and b_tile * p_tile * D * dtype_bytes > budget_bytes:
        b_tile -= 1
        while B % b_tile:
            b_tile -= 1
    while p_tile > 8 and b_tile * p_tile * D * dtype_bytes > budget_bytes:
        p_tile -= 8
    return b_tile, p_tile


# ------------------------------ jitted forward --------------------------------
def _pc_forward(x, U, r, *, kernel_size, stride, precision, alpha, lam):
    B, C, H, W = x.shape
    kh, kw = kernel_size
    K = U.shape[0]
    D = C * kh * kw

    patches, nph, npw = unfold_to_patches(x, kernel_size, stride)   # (B, P, D)
    P = nph * npw
    u_mat = U.reshape(K, D)                                         # (K, D)
    r_t = r.reshape(K, P).T                                         # (P, K)

    b_tile, p_tile = _choose_tiles(B, P, D)
    P_pad = _round_up(P, p_tile)
    if P_pad != P:
        # Zero padding is self-masking: padded patch rows and r rows are zero,
        # so pred = tanh(0) = 0 and err = 0 there -> zero contribution.
        patches = jnp.pad(patches, ((0, 0), (0, P_pad - P), (0, 0)))
        r_t = jnp.pad(r_t, ((0, P_pad - P), (0, 0)))
    n_p = P_pad // p_tile
    n_b = B // b_tile

    partials = pl.pallas_call(
        _pc_kernel,
        grid=(n_p, n_b),
        out_shape=jax.ShapeDtypeStruct((n_p, 8, 128), jnp.float32),
        in_specs=[
            pl.BlockSpec((b_tile, p_tile, D), lambda p, b: (b, p, 0)),
            pl.BlockSpec((p_tile, K), lambda p, b: (p, 0)),
            pl.BlockSpec((K, D), lambda p, b: (0, 0)),
        ],
        out_specs=pl.BlockSpec((1, 8, 128), lambda p, b: (p, 0, 0)),
        scratch_shapes=[pltpu.VMEM((p_tile, D), jnp.float32)],
        compiler_params=pltpu.CompilerParams(
            dimension_semantics=("parallel", "arbitrary"),
            vmem_limit_bytes=32 * 1024 * 1024),
    )(patches, r_t, u_mat)

    sq_sum = jnp.sum(partials[:, 0, 0])
    abs_sum = jnp.sum(partials[:, 1, 0])

    recon = precision * sq_sum                 # precision * ||error||^2
    mae = abs_sum / (B * P * D)                # true element count (unpadded)
    up = lam * jnp.mean(U * U)                 # priors don't depend on x
    rp = alpha * jnp.mean(r * r)
    total = recon + up + rp
    return recon, mae, up, rp, total


# ------------------------------ layer wrapper --------------------------------
class PredictiveCodingLayerPallas:
    def __init__(self, input_size, n_causes=32, kernel_size=8, stride=4,
                 padding=0, k1=0.1, k2=0.1, sigma2=1.0, alpha=0.1, lam=0.1,
                 key=jax.random.PRNGKey(0)):
        assert padding == 0  # TODO(synk): padding > 0 unfold not implemented (module default is 0)
        self.input_size = input_size
        self.n_causes = n_causes
        self.kernel_size = (kernel_size, kernel_size) if isinstance(kernel_size, int) else kernel_size
        self.stride = (stride, stride) if isinstance(stride, int) else stride
        C, H, W = input_size
        kh, kw = self.kernel_size
        sh, sw = self.stride
        self.n_patches_height = (H - kh) // sh + 1
        self.n_patches_width = (W - kw) // sw + 1
        self.n_patches = self.n_patches_height * self.n_patches_width
        self.precision = 1.0 / sigma2
        self.alpha = alpha
        self.lam = lam

        kU, kr = jax.random.split(key)
        self.U = jax.random.normal(kU, (n_causes, C, kh, kw), dtype=jnp.float32)
        self.r = jax.random.normal(
            kr, (1, n_causes, self.n_patches_height, self.n_patches_width),
            dtype=jnp.float32)

        self._forward = jax.jit(functools.partial(
            _pc_forward, kernel_size=self.kernel_size, stride=self.stride,
            precision=self.precision, alpha=self.alpha, lam=self.lam))

        # loss "attributes" (filled by forward, mirroring the torch module)
        self.reconstruction_loss = 0.0
        self.mean_abs_error = 0.0
        self.U_prior_loss = 0.0
        self.r_prior_loss = 0.0
        self.total_loss = 0.0

    def forward(self, x):
        recon, mae, up, rp, total = self._forward(x, self.U, self.r)
        self.reconstruction_loss = recon
        self.mean_abs_error = mae
        self.U_prior_loss = up
        self.r_prior_loss = rp
        self.total_loss = total
        # forward returns the causes r (shape (1, K, nph, npw)), as in PyTorch
        return self.r

    __call__ = forward


# ------------------------------ reference check ------------------------------
def reference_losses(layer, x):
    kh, kw = layer.kernel_size
    sh, sw = layer.stride
    B, C, H, W = x.shape
    nph = (H - kh) // sh + 1
    npw = (W - kw) // sw + 1
    i_idx = (jnp.arange(nph) * sh)[:, None] + jnp.arange(kh)[None, :]
    j_idx = (jnp.arange(npw) * sw)[:, None] + jnp.arange(kw)[None, :]
    p = x[:, :, i_idx[:, :, None, None], j_idx[None, None, :, :]]      # (B,C,nph,kh,npw,kw)
    patches6 = jnp.transpose(p, (0, 1, 3, 5, 2, 4))                    # (B,C,kh,kw,nph,npw)
    pred = jnp.tanh(jnp.einsum('kcij,bkpq->bcijpq', layer.U, layer.r))
    err = patches6 - pred
    recon = layer.precision * jnp.sum(err ** 2)
    mae = jnp.mean(jnp.abs(err))
    up = layer.lam * jnp.mean(layer.U ** 2)
    rp = layer.alpha * jnp.mean(layer.r ** 2)
    return recon, mae, up, rp, recon + up + rp


if __name__ == "__main__":
    key = jax.random.PRNGKey(0)
    kx, kp = jax.random.split(key)

    B, C, H, W = 2, 4, 16, 16
    layer = PredictiveCodingLayerPallas(
        input_size=(C, H, W), n_causes=32, kernel_size=8, stride=4,
        padding=0, sigma2=1.0, alpha=0.1, lam=0.1, key=kp)

    x = jax.random.normal(kx, (B, C, H, W), dtype=jnp.float32)

    r_out = layer(x)
    jax.block_until_ready(r_out)
    jax.block_until_ready(layer.total_loss)

    # correctness check vs. pure-JAX reference of the PyTorch math
    recon_r, mae_r, up_r, rp_r, total_r = reference_losses(layer, x)
    np.testing.assert_allclose(np.asarray(layer.reconstruction_loss), np.asarray(recon_r), rtol=1e-4, atol=1e-6)
    np.testing.assert_allclose(np.asarray(layer.mean_abs_error), np.asarray(mae_r), rtol=1e-4, atol=1e-6)
    np.testing.assert_allclose(np.asarray(layer.U_prior_loss), np.asarray(up_r), rtol=1e-4, atol=1e-6)
    np.testing.assert_allclose(np.asarray(layer.r_prior_loss), np.asarray(rp_r), rtol=1e-4, atol=1e-6)
    np.testing.assert_allclose(np.asarray(layer.total_loss), np.asarray(total_r), rtol=1e-4, atol=1e-6)
    assert r_out.shape == (1, 32, layer.n_patches_height, layer.n_patches_width)

    print("KERNEL_OK")
</pallas_src>

<mosaic_0001>
module attributes {stable_mosaic.version = 11 : i64} {
  func.func @_pc_kernel(%arg0: i32, %arg1: i32, %arg2: memref<2x16x256xf32, #tpu.memory_space<vmem>>, %arg3: memref<16x32xf32, #tpu.memory_space<vmem>>, %arg4: memref<32x256xf32, #tpu.memory_space<vmem>>, %arg5: memref<1x8x128xf32, #tpu.memory_space<vmem>>, %arg6: memref<16x256xf32, #tpu.memory_space<vmem>>) attributes {dimension_semantics = [#tpu.dimension_semantics<parallel>, #tpu.dimension_semantics<arbitrary>], iteration_bounds = array<i64: 1, 1>, scalar_prefetch = 0 : i64, scratch_operands = 1 : i64, tpu.core_type = #tpu.core_type<tc>, window_params = [{transform_indices = @transform_0, window_bounds = array<i64: 2, 16, 256>}, {transform_indices = @transform_1, window_bounds = array<i64: 16, 32>}, {pipeline_mode = #tpu.pipeline_mode<synchronous>, transform_indices = @transform_2, window_bounds = array<i64: 32, 256>}, {transform_indices = @transform_3, window_bounds = array<i64: 1, 8, 128>}]} {
    %c0_i32 = arith.constant 0 : i32
    %0 = arith.cmpi eq, %arg1, %c0_i32 : i32
    %1 = arith.extui %0 : i1 to i32
    %c0_i32_0 = arith.constant 0 : i32
    %2 = arith.cmpi ne, %1, %c0_i32_0 : i32
    scf.if %2 {
      %c0_14 = arith.constant 0 : index
      %c0_15 = arith.constant 0 : index
      %31 = vector.load %arg3[%c0_14, %c0_15] : memref<16x32xf32, #tpu.memory_space<vmem>>, vector<16x32xf32>
      %c0_16 = arith.constant 0 : index
      %c0_17 = arith.constant 0 : index
      %32 = vector.load %arg4[%c0_16, %c0_17] : memref<32x256xf32, #tpu.memory_space<vmem>>, vector<32x256xf32>
      %cst_18 = arith.constant dense<0.000000e+00> : vector<16x256xf32>
      %33 = tpu.matmul %31, %32, %cst_18 {dimension_numbers = #tpu.dot_dimension_numbers<[1], [0], [0], [1], [0, 0, 1, 1], [], []>} : vector<16x32xf32>, vector<32x256xf32>, vector<16x256xf32> -> vector<16x256xf32>
      %34 = math.tanh %33 : vector<16x256xf32>
      %c0_19 = arith.constant 0 : index
      %c0_20 = arith.constant 0 : index
      %35 = vector.load %arg6[%c0_19, %c0_20] : memref<16x256xf32, #tpu.memory_space<vmem>>, vector<16x256xf32>
      tpu.vector_store %arg6[%c0_19, %c0_20], %34 {strides = array<i32>} : memref<16x256xf32, #tpu.memory_space<vmem>>, vector<16x256xf32>,
      %cst_21 = arith.constant 0.000000e+00 : f32
      %36 = vector.broadcast %cst_21 : f32 to vector<1x8x128xf32>
      %c0_22 = arith.constant 0 : index
      %c0_23 = arith.constant 0 : index
      %c0_24 = arith.constant 0 : index
      %37 = vector.load %arg5[%c0_22, %c0_23, %c0_24] : memref<1x8x128xf32, #tpu.memory_space<vmem>>, vector<1x8x128xf32>
      tpu.vector_store %arg5[%c0_22, %c0_23, %c0_24], %36 {strides = array<i32>} : memref<1x8x128xf32, #tpu.memory_space<vmem>>, vector<1x8x128xf32>,
    } else {
    }
    %c0 = arith.constant 0 : index
    %c0_1 = arith.constant 0 : index
    %c0_2 = arith.constant 0 : index
    %3 = vector.load %arg2[%c0, %c0_1, %c0_2] : memref<2x16x256xf32, #tpu.memory_space<vmem>>, vector<2x16x256xf32>
    %c0_3 = arith.constant 0 : index
    %c0_4 = arith.constant 0 : index
    %4 = vector.load %arg6[%c0_3, %c0_4] : memref<16x256xf32, #tpu.memory_space<vmem>>, vector<16x256xf32>
    %5 = vector.shape_cast %4 : vector<16x256xf32> to vector<1x16x256xf32>
    %6 = vector.broadcast %5 : vector<1x16x256xf32> to vector<2x16x256xf32>
    %7 = arith.subf %3, %6 : vector<2x16x256xf32>
    %8 = arith.mulf %7, %7 : vector<2x16x256xf32>
    %9 = vector.shape_cast %8 : vector<2x16x256xf32> to vector<1x2x16x256xf32>
    %cst = arith.constant dense<0.000000e+00> : vector<1xf32>
    %10 = vector.multi_reduction <add>, %9, %cst [1, 2, 3] : vector<1x2x16x256xf32> to vector<1xf32>
    %11 = vector.shape_cast %10 : vector<1xf32> to vector<1x1x1x1xf32>
    %12 = vector.extract %11[0, 0, 0, 0] : f32 from vector<1x1x1x1xf32>
    %13 = math.absf %7 : vector<2x16x256xf32>
    %14 = vector.shape_cast %13 : vector<2x16x256xf32> to vector<1x2x16x256xf32>
    %cst_5 = arith.constant dense<0.000000e+00> : vector<1xf32>
    %15 = vector.multi_reduction <add>, %14, %cst_5 [1, 2, 3] : vector<1x2x16x256xf32> to vector<1xf32>
    %16 = vector.shape_cast %15 : vector<1xf32> to vector<1x1x1x1xf32>
    %17 = vector.extract %16[0, 0, 0, 0] : f32 from vector<1x1x1x1xf32>
    %18 = tpu.iota {dimensions = array<i32: 1>} : vector<1x8x128xi32>
    %c0_6 = arith.constant 0 : index
    %c0_7 = arith.constant 0 : index
    %c0_8 = arith.constant 0 : index
    %19 = vector.load %arg5[%c0_6, %c0_7, %c0_8] : memref<1x8x128xf32, #tpu.memory_space<vmem>>, vector<1x8x128xf32>
    %c0_i32_9 = arith.constant 0 : i32
    %20 = vector.broadcast %c0_i32_9 : i32 to vector<1x8x128xi32>
    %21 = arith.cmpi eq, %18, %20 : vector<1x8x128xi32>
    %c1_i32 = arith.constant 1 : i32
    %22 = vector.broadcast %c1_i32 : i32 to vector<1x8x128xi32>
    %23 = arith.cmpi eq, %18, %22 : vector<1x8x128xi32>
    %cst_10 = arith.constant 0.000000e+00 : f32
    %24 = vector.broadcast %17 : f32 to vector<1x8x128xf32>
    %25 = vector.broadcast %cst_10 : f32 to vector<1x8x128xf32>
    %26 = arith.select %23, %24, %25 : vector<1x8x128xi1>, vector<1x8x128xf32>
    %27 = vector.broadcast %12 : f32 to vector<1x8x128xf32>
    %28 = arith.select %21, %27, %26 : vector<1x8x128xi1>, vector<1x8x128xf32>
    %29 = arith.addf %19, %28 : vector<1x8x128xf32>
    %c0_11 = arith.constant 0 : index
    %c0_12 = arith.constant 0 : index
    %c0_13 = arith.constant 0 : index
    %30 = vector.load %arg5[%c0_11, %c0_12, %c0_13] : memref<1x8x128xf32, #tpu.memory_space<vmem>>, vector<1x8x128xf32>
    tpu.vector_store %arg5[%c0_11, %c0_12, %c0_13], %29 {strides = array<i32>} : memref<1x8x128xf32, #tpu.memory_space<vmem>>, vector<1x8x128xf32>,
    return
  }
  func.func @transform_0(%arg0: i32, %arg1: i32) -> (i32, i32, i32) {
    %c0_i32 = arith.constant 0 : i32
    %c0_i32_0 = arith.constant 0 : i32
    return %arg1, %arg0, %c0_i32 : i32, i32, i32
  }
  func.func @transform_1(%arg0: i32, %arg1: i32) -> (i32, i32) {
    %c0_i32 = arith.constant 0 : i32
    %c0_i32_0 = arith.constant 0 : i32
    return %arg0, %c0_i32 : i32, i32
  }
  func.func @transform_2(%arg0: i32, %arg1: i32) -> (i32, i32) {
    %c0_i32 = arith.constant 0 : i32
    %c0_i32_0 = arith.constant 0 : i32
    %c0_i32_1 = arith.constant 0 : i32
    return %c0_i32, %c0_i32_0 : i32, i32
  }
  func.func @transform_3(%arg0: i32, %arg1: i32) -> (i32, i32, i32) {
    %c0_i32 = arith.constant 0 : i32
    %c0_i32_0 = arith.constant 0 : i32
    %c0_i32_1 = arith.constant 0 : i32
    return %arg0, %c0_i32, %c0_i32_0 : i32, i32, i32
  }
}

</mosaic_0001>

<llo_original>
// kernel: _pc_forward.1
$region0: #{_pc_forward.1}
  #allocation0 [shape = 'u32[]', space=smem, size = 0x4, offset = 0x4, fixed_abs, tag = 'smem constant byte address 0x4 - core index']
  #allocation1 [shape = 'u32[144,128]{1,0:T(1,128)}', space=vmem, size = 0x12000, scoped, tag = 'internal scratch']
  #allocation2 [shape = 'f32[16,256]{1,0:T(8,128)}', space=vmem, size = 0x4000, scoped, tag = 'scratch operand']
  %s0 = inlined_call_operand.vmem [shape: f32[2,16,256], index: 0, kind: input, shape index: {}]
  %s1 = inlined_call_operand.vmem [shape: f32[16,32], index: 1, kind: input, shape index: {}]
  %s2 = inlined_call_operand.vmem [shape: f32[32,256], index: 2, kind: input, shape index: {}]
  %s3 = inlined_call_operand.vmem [shape: f32[1,8,128], index: 3, kind: output, shape index: {}]
  %s4 = sld [smem:[#allocation0]]
  $region26: #{_pc_forward.1} parent=0
    _
  %s6 = ssub.s32 1, %s4
  %s7 = scalar_select 0, %s6, %s4
  // Predicated region
  $region2: #{_pc_forward.1} parent=0 // pred_check
    _
  $region3: #{_pc_forward.1} parent=0 // pred_check_branch
    %9 = sbr.rel (0) target = $region5
  $region4: #{_pc_forward.1} parent=0 // pred_region
    _
  $region5: #{_pc_forward.1} parent=0 // pred_fallthru
    _
  // Predicated region
  $region6: #{_pc_forward.1} parent=0 // pred_check
    _
  $region7: #{_pc_forward.1} parent=0 // pred_check_branch
    %11 = sbr.rel (0) target = $region9
  $region8: #{_pc_forward.1} parent=0 // pred_region
    _
  $region9: #{_pc_forward.1} parent=0 // pred_fallthru
    _
  // Predicated region
  $region10: #{_pc_forward.1} parent=0 // pred_check
    _
  $region11: #{_pc_forward.1} parent=0 // pred_check_branch
    %13 = sbr.rel (0) target = $region13
  $region12: #{_pc_forward.1} parent=0 // pred_region
    _
  $region13: #{_pc_forward.1} parent=0 // pred_fallthru
    _
  %p14 = scmp.eq.s32.totalorder 0, 0
  // Predicated region
  $region14: #{_pc_forward.1} parent=0 // pred_check
    %p15 = pneg %p14
  $region15: #{_pc_forward.1} parent=0 // pred_check_branch
    %17 = sbr.rel (%p15) target = $region17
  $region16: #{_pc_forward.1} parent=0 // pred_region
    %v18 = vld [vmem:[%s1] sm:$0xff]
    %v19 = vld [vmem:[%s1 + $0x8] sm:$0xff]
    %v20 = vld [vmem:[%s2] sm:$0xff]
    %v21 = vld [vmem:[%s2 + $0x8] sm:$0xff]
    %v22 = vld [vmem:[%s2 + $0x10] sm:$0xff]
    %v23 = vld [vmem:[%s2 + $0x18] sm:$0xff]
    %v24 = vld [vmem:[%s2 + $0x20] sm:$0xff]
    %v25 = vld [vmem:[%s2 + $0x28] sm:$0xff]
    %v26 = vld [vmem:[%s2 + $0x30] sm:$0xff]
    %v27 = vld [vmem:[%s2 + $0x38] sm:$0xff]
    %vm28 = vcmask 261120
    %v30 = vsel %vm28, %v18, 0
    %v33 = vsel %vm28, %v19, 0
    %35 = vmatprep.subr.mxu0 %v21
    %36 = vmatpush1.msra.mxu0 %v20
    %37 = vmatprep.subr.mxu0 %v23
    %38 = vmatpush1.msra.mxu0 %v22
    %39 = vmatprep.subr.mxu0 %v25
    %40 = vmatpush1.msra.mxu0 %v24
    %41 = vmatprep.subr.mxu0 %v27
    %42 = vmatpush1.msra.mxu0 %v26
    %43 = vmatprep.subr.mxu0 0.0
    %44 = vmatpush1.msra.mxu0 0.0
    %45 = vmatprep.subr.mxu0 0.0
    %46 = vmatpush1.msra.mxu0 0.0
    %47 = vmatprep.subr.mxu0 0.0
    %48 = vmatpush1.msra.mxu0 0.0
    %49 = vmatprep.subr.mxu0 0.0
    %50 = vmatpush1.msra.mxu0 0.0
    %51 = vmatprep.subr.mxu0 0.0
    %52 = vmatpush1.msra.mxu0 0.0
    %53 = vmatprep.subr.mxu0 0.0
    %54 = vmatpush1.msra.mxu0 0.0
    %55 = vmatprep.subr.mxu0 0.0
    %56 = vmatpush1.msra.mxu0 0.0
    %57 = vmatprep.subr.mxu0 0.0
    %58 = vmatpush1.msra.mxu0 0.0
    %59 = vmatprep.subr.mxu0 0.0
    %60 = vmatpush1.msra.mxu0 0.0
    %61 = vmatprep.subr.mxu0 0.0
    %62 = vmatpush1.msra.mxu0 0.0
    %63 = vmatprep.subr.mxu0 0.0
    %64 = vmatpush1.msra.mxu0 0.0
    %65 = vmatprep.subr.mxu0 0.0
    %66 = vmatpush1.msra.mxu0 0.0
    %67 = vmatprep.subr.mxu0 0.0
    %68 = vmatpush1.msra.mxu0 0.0
    %69 = vmatprep.subr.mxu0 0.0
    %70 = vmatpush1.msra.mxu0 0.0
    %71 = vmatprep.subr.mxu0 0.0
    %72 = vmatpush1.msra.mxu0 0.0
    %73 = vmatprep.subr.mxu0 0.0
    %74 = vmatpush1.msra.mxu0 0.0
    %75 = vmatprep.subr.mxu0 0.0
    %76 = vmatpush1.msra.mxu0 0.0
    %77 = vmatprep.subr.mxu0 0.0
    %78 = vmatpush1.msra.mxu0 0.0
    %79 = vmatprep.subr.mxu0 0.0
    %80 = vmatpush1.msra.mxu0 0.0
    %81 = vmatprep.subr.mxu0 0.0
    %82 = vmatpush1.msra.mxu0 0.0
    %83 = vmatprep.subr.mxu0 0.0
    %84 = vmatpush1.msra.mxu0 0.0
    %85 = vmatprep.subr.mxu0 0.0
    %86 = vmatpush1.msra.mxu0 0.0
    %87 = vmatprep.subr.mxu0 0.0
    %88 = vmatpush1.msra.mxu0 0.0
    %89 = vmatprep.subr.mxu0 0.0
    %90 = vmatpush1.msra.mxu0 0.0
    %91 = vmatprep.subr.mxu0 0.0
    %92 = vmatpush1.msra.mxu0 0.0
    %93 = vmatprep.subr.mxu0 0.0
    %94 = vmatpush1.msra.mxu0 0.0
    %95 = vmatprep.subr.mxu0 0.0
    %96 = vmatpush1.msra.mxu0 0.0
    %97 = vmatprep.subr.mxu0 0.0
    %98 = vmatpush1.msra.mxu0 0.0
    %99 = vmatprep.mubr.f32.mxu0 0.0
    %100 = vmatmul.mubr.f32.gmra.mrb[0].mxu0 %v30
    %v101 = vpop.f32.mrb[0].mxu0
    %v102 = vadd.f32 0.0, %v101
    %v103 = vpop.f32.mrb[0].mxu0
    %v104 = vadd.f32 0.0, %v103
    %105 = vmatprep.mubr.f32.mxu0 0.0
    %106 = vmatmul.mubr.f32.gmra.mrb[0].mxu0 %v33
    %v107 = vpop.f32.mrb[0].mxu0
    %v108 = vadd.f32 0.0, %v107
    %v109 = vpop.f32.mrb[0].mxu0
    %v110 = vadd.f32 0.0, %v109
    %111 = vdwg.mxu0
    %v112 = vtanh.pop %v102
    %v113 = vtanh.pop %v104
    %v114 = vtanh.pop %v108
    %v115 = vtanh.pop %v110
    %116 = vst [vmem:[#allocation2] sm:$0xff] %v112
    %117 = vst [vmem:[#allocation2 + $0x8] sm:$0xff] %v113
    %118 = vst [vmem:[#allocation2 + $0x10] sm:$0xff] %v114
    %119 = vst [vmem:[#allocation2 + $0x18] sm:$0xff] %v115
    %120 = vst [vmem:[%s3] sm:$0xff] 0.0
  $region17: #{_pc_forward.1} parent=0 // pred_fallthru
    _
  %v121 = vld [vmem:[%s0] sm:$0xff]
  %v122 = vld [vmem:[%s0 + $0x8] sm:$0xff]
  %v123 = vld [vmem:[%s0 + $0x10] sm:$0xff]
  %v124 = vld [vmem:[%s0 + $0x18] sm:$0xff]
  %v125 = vld [vmem:[%s0 + $0x20] sm:$0xff]
  %v126 = vld [vmem:[%s0 + $0x28] sm:$0xff]
  %v127 = vld [vmem:[%s0 + $0x30] sm:$0xff]
  %v128 = vld [vmem:[%s0 + $0x38] sm:$0xff]
  %v129 = vld [vmem:[#allocation2] sm:$0xff]
  %v130 = vld [vmem:[#allocation2 + $0x8] sm:$0xff]
  %v131 = vld [vmem:[#allocation2 + $0x10] sm:$0xff]
  %v132 = vld [vmem:[#allocation2 + $0x18] sm:$0xff]
  %v133 = vsub.f32 %v121, %v129
  %v134 = vsub.f32 %v122, %v130
  %v135 = vsub.f32 %v123, %v131
  %v136 = vsub.f32 %v124, %v132
  %v137 = vsub.f32 %v125, %v129
  %v138 = vsub.f32 %v126, %v130
  %v139 = vsub.f32 %v127, %v131
  %v140 = vsub.f32 %v128, %v132
  %v141 = vmul.f32 %v133, %v133
  %v142 = vmul.f32 %v134, %v134
  %v143 = vmul.f32 %v135, %v135
  %v144 = vmul.f32 %v136, %v136
  %v145 = vmul.f32 %v137, %v137
  %v146 = vmul.f32 %v138, %v138
  %v147 = vmul.f32 %v139, %v139
  %v148 = vmul.f32 %v140, %v140
  %v149 = vadd.f32 %v141, %v142
  %v150 = vadd.f32 %v149, %v143
  %v151 = vadd.f32 %v150, %v144
  %v152 = vadd.f32 %v151, %v145
  %v153 = vadd.f32 %v152, %v146
  %v154 = vadd.f32 %v153, %v147
  %v155 = vadd.f32 %v154, %v148
  %156 = vadd.xlane.f32.xlu0 %v155
  %v157 = vpop.xlane.xlu0 %156
  %v158 = vrot.slane %v157, 4
  %v159 = vadd.f32 %v157, %v158
  %v160 = vrot.slane %v159, 2
  %v161 = vadd.f32 %v159, %v160
  %v162 = vrot.slane %v161, 1
  %v163 = vadd.f32 %v161, %v162
  %s164 = vtos %v163
  %v165 = vand.u32 2147483647, %v133
  %v166 = vand.u32 2147483647, %v134
  %v167 = vand.u32 2147483647, %v135
  %v168 = vand.u32 2147483647, %v136
  %v169 = vand.u32 2147483647, %v137
  %v170 = vand.u32 2147483647, %v138
  %v171 = vand.u32 2147483647, %v139
  %v172 = vand.u32 2147483647, %v140
  %v173 = vadd.f32 %v165, %v166
  %v174 = vadd.f32 %v173, %v167
  %v175 = vadd.f32 %v174, %v168
  %v176 = vadd.f32 %v175, %v169
  %v177 = vadd.f32 %v176, %v170
  %v178 = vadd.f32 %v177, %v171
  %v179 = vadd.f32 %v178, %v172
  %180 = vadd.xlane.f32.xlu0 %v179
  %v181 = vpop.xlane.xlu0 %180
  %v182 = vrot.slane %v181, 4
  %v183 = vadd.f32 %v181, %v182
  %v184 = vrot.slane %v183, 2
  %v185 = vadd.f32 %v183, %v184
  %v186 = vrot.slane %v185, 1
  %v187 = vadd.f32 %v185, %v186
  %s188 = vtos %v187
  %v189 = vlaneseq
  %v190 = vshrl.u32 %v189, 7
  %v191 = vld [vmem:[%s3] sm:$0xff]
  %vm192 = vcmp.eq.s32.totalorder %v190, 0
  %vm193 = vcmp.eq.s32.totalorder %v190, 1
  %v194 = vstv %s188
  %v195 = vsel %vm193, %v194, 0.0
  %v196 = vstv %s164
  %v197 = vsel %vm192, %v196, %v195
  %v198 = vadd.f32 %v191, %v197
  %199 = vst [vmem:[%s3] sm:$0xff] %v198
  // Predicated region
  $region18: #{_pc_forward.1} parent=0 // pred_check
    _
  $region19: #{_pc_forward.1} parent=0 // pred_check_branch
    %201 = sbr.rel (0) target = $region21
  $region20: #{_pc_forward.1} parent=0 // pred_region
    _
  $region21: #{_pc_forward.1} parent=0 // pred_fallthru
    _
  // Predicated region
  $region22: #{_pc_forward.1} parent=0 // pred_check
    _
  $region23: #{_pc_forward.1} parent=0 // pred_check_branch
    %203 = sbr.rel (0) target = $region25
  $region24: #{_pc_forward.1} parent=0 // pred_region
    _
  $region25: #{_pc_forward.1} parent=0 // pred_fallthru
    _

</llo_original>
